<compile_context>
chip_gen: v7x
topology: tpu7x:2x2x1
jax: 0.10.0
libtpu: 0.0.40
codegen_flags: <defaults>
</compile_context>

<pallas_src>
import functools

import jax
import jax.numpy as jnp
from jax import lax
from jax.experimental import pallas as pl
from jax.experimental.pallas import tpu as pltpu


def _nce_loss_ref(batch_similarities, temperature=0.1):
    """Pure-JAX reference mirroring the PyTorch module."""
    s = batch_similarities.astype(jnp.float32) / temperature
    ax1 = jax.nn.softmax(s, axis=1)
    ax2 = jax.nn.softmax(s, axis=0)
    scores = jnp.concatenate((-jnp.log(jnp.diag(ax1)), -jnp.log(jnp.diag(ax2))))
    return jnp.mean(scores)


def _nce_kernel(*refs, temperature, n, tm, tiles_per_chunk, has_tail,
                diag_via_input):
    if diag_via_input:
        sim_ref, diag_ref, acc_ref, colmax_ref, colsum_ref = refs
    else:
        sim_ref, acc_ref, colmax_ref, colsum_ref = refs
        diag_ref = None

    p = pl.program_id(0)
    t = pl.program_id(1)
    tile_idx = p * tiles_per_chunk + t
    row_offset = tile_idx * tm

    @pl.when(t == 0)
    def _init():
        acc_ref[...] = jnp.zeros_like(acc_ref)
        colmax_ref[...] = jnp.full_like(colmax_ref, -jnp.inf)
        colsum_ref[...] = jnp.zeros_like(colsum_ref)

    inv_t = 1.0 / float(temperature)
    scaled = sim_ref[...].astype(jnp.float32) * inv_t               # (tm, n) f32

    if has_tail:
        row_ids = row_offset + lax.broadcasted_iota(jnp.int32, (tm, 1), 0)
        row_valid = row_ids < n                                      # (tm, 1)

    # ---- row-wise (dim=1) logsumexp: the full row is resident -> exact. ------
    row_max = jnp.max(scaled, axis=1, keepdims=True)                 # (tm, 1)
    e_row = jnp.exp(scaled - row_max)                                # single big exp
    row_sum = jnp.sum(e_row, axis=1, keepdims=True)                  # (tm, 1)
    row_lse = jnp.log(row_sum) + row_max                             # (tm, 1)

    # ---- column (dim=0) statistics, derived from e_row (no 2nd big exp). -----
    row_max_m = jnp.where(row_valid, row_max, -jnp.inf) if has_tail else row_max
    ref_max = jnp.max(row_max_m, axis=0, keepdims=True)              # (1, 1) tile max
    a = jnp.exp(row_max - ref_max)                                   # (tm, 1), <= 1
    weighted = e_row * a                                             # == exp(scaled - ref_max)
    if has_tail:
        weighted = jnp.where(row_valid, weighted, 0.0)               # drop padded rows
    # Column partial sums on the otherwise-idle MXU (bf16 stream, f32 acc).
    ones8 = jnp.ones((8, tm), jnp.bfloat16)
    col_part = jnp.dot(ones8, weighted.astype(jnp.bfloat16),
                       preferred_element_type=jnp.float32)           # (8, n), rows identical

    scaled_m = jnp.where(row_valid, scaled, -jnp.inf) if has_tail else scaled
    tile_col_max = jnp.max(scaled_m, axis=0, keepdims=True)          # (1, n)

    old_max = colmax_ref[...]                                        # (8, n)
    new_max = jnp.maximum(old_max, tile_col_max)                     # (8, n)
    # Fold in log space: col_part == 0 -> exp(-inf) = 0, never inf * 0 = NaN.
    contrib = jnp.exp(jnp.log(col_part) + (ref_max - new_max))       # (8, n)
    colsum_ref[...] = colsum_ref[...] * jnp.exp(old_max - new_max) + contrib
    colmax_ref[...] = new_max

    # ---- diagonal entries of this row tile. -----------------------------------
    if diag_via_input:
        # (tm, tm) diagonal block delivered by its own (block-aligned) DMA.
        dblk = diag_ref[...].astype(jnp.float32) * inv_t
        rr = lax.broadcasted_iota(jnp.int32, (tm, tm), 0)
        cc = lax.broadcasted_iota(jnp.int32, (tm, tm), 1)
        dmask = cc == rr
        if has_tail:
            dmask = jnp.logical_and(dmask, (row_offset + rr) < n)
        diag_part = jnp.sum(jnp.where(dmask, dblk, 0.0), keepdims=True)
    else:
        # Masked sum straight from `scaled` (already f32, already / T); rows
        # past N can never match a column index < N, so ragged tails are
        # excluded for free.  Hidden under the HBM-bound DMA for f32 inputs.
        col_ids = lax.broadcasted_iota(jnp.int32, (1, n), 1)
        row_ids_g = row_offset + lax.broadcasted_iota(jnp.int32, (tm, 1), 0)
        diag_part = jnp.sum(jnp.where(col_ids == row_ids_g, scaled, 0.0),
                            keepdims=True)                           # (1, 1)

    row_lse_m = jnp.where(row_valid, row_lse, 0.0) if has_tail else row_lse
    acc_ref[...] += jnp.sum(row_lse_m, keepdims=True) - 2.0 * diag_part


_TM_CANDIDATES = (1024, 512, 256, 128, 64, 32, 16, 8)


def _vmem_capacity_bytes():
    try:
        info = pltpu.get_tpu_info()
        cap = getattr(info, "vmem_capacity_bytes", None)
        if cap:
            return int(cap)
    except Exception:
        pass
    return 64 * 2**20          # conservative default (v7x per-core VMEM)


def _pick_tm(n, itemsize, budget):
    """Largest row tile that keeps >=4 pipelined grid steps and fits VMEM."""
    cap_rows = max(8, n // 4)

    def fits(c):
        need = (2 * c * n * itemsize       # double-buffered native-dtype input
                + 14 * c * n               # live f32/bf16 temporaries
                + 10 * c * c               # diagonal block + mask
                + (1 << 20))               # headroom
        return need <= budget

    fitting = [c for c in _TM_CANDIDATES if c <= cap_rows and fits(c)]
    if not fitting:
        return 8
    best = fitting[0]
    if n % best == 0:
        return best
    for c in fitting:                      # prefer a divisor of comparable size
        if n % c == 0 and 2 * c > best:
            return c
    return best                            # ragged tail handled in-kernel


def nce_loss(batch_similarities, temperature=0.1):
    """Pallas TPU implementation of NCELoss.forward. Returns a scalar f32 loss."""
    n, m = batch_similarities.shape
    if n != m:
        raise ValueError("NCELoss expects a square similarity matrix")
    if n < 16:
        # Tiny batches: per-grid-step overhead dwarfs the math; XLA wins.
        return _nce_loss_ref(batch_similarities, temperature)

    itemsize = jnp.dtype(batch_similarities.dtype).itemsize
    vmem_cap = _vmem_capacity_bytes()
    vmem_limit = int(min(vmem_cap * 0.8, 100 * 2**20))   # ~100MiB v5e/v6e, ~51MiB v7x
    tm = _pick_tm(n, itemsize, int(vmem_limit * 0.7))
    total_tiles = (n + tm - 1) // tm
    has_tail = (n % tm) != 0
    n_par = 2 if total_tiles % 2 == 0 else 1     # shard row tiles across v7x's 2 TCs
    tiles_per_chunk = total_tiles // n_par
    # f32: masked in-tile diagonal (hidden under HBM-bound DMA).
    # sub-f32: block-aligned (tm, tm) diagonal DMA (hidden under compute).
    diag_via_input = itemsize < 4 and tm % 128 == 0

    kernel = functools.partial(
        _nce_kernel, temperature=float(temperature), n=n, tm=tm,
        tiles_per_chunk=tiles_per_chunk, has_tail=has_tail,
        diag_via_input=diag_via_input)

    in_specs = [pl.BlockSpec((tm, n), lambda p, t: (p * tiles_per_chunk + t, 0))]
    operands = [batch_similarities]
    if diag_via_input:
        in_specs.append(pl.BlockSpec(
            (tm, tm),
            lambda p, t: (p * tiles_per_chunk + t, p * tiles_per_chunk + t)))
        operands.append(batch_similarities)

    out_shape = (
        jax.ShapeDtypeStruct((n_par, 1, 1), jnp.float32),   # sum(row_lse) - 2*sum(diag)
        jax.ShapeDtypeStruct((n_par, 8, n), jnp.float32),   # running column max
        jax.ShapeDtypeStruct((n_par, 8, n), jnp.float32),   # running column sum-exp
    )
    out_specs = [
        pl.BlockSpec((None, 1, 1), lambda p, t: (p, 0, 0)),
        pl.BlockSpec((None, 8, n), lambda p, t: (p, 0, 0)),
        pl.BlockSpec((None, 8, n), lambda p, t: (p, 0, 0)),
    ]

    acc, colmax, colsum = pl.pallas_call(
        kernel,
        out_shape=out_shape,
        grid_spec=pltpu.PrefetchScalarGridSpec(
            num_scalar_prefetch=0,
            grid=(n_par, tiles_per_chunk),
            in_specs=in_specs,
            out_specs=out_specs),
        compiler_params=pltpu.CompilerParams(
            dimension_semantics=("parallel", "arbitrary"),
            vmem_limit_bytes=vmem_limit),
        cost_estimate=pl.CostEstimate(
            flops=int(8 * n * n),
            transcendentals=int(n * n),
            bytes_accessed=int(n * n * itemsize)),
    )(*operands)

    # Tiny O(n_par * N) merge of the per-chunk column statistics in plain JAX.
    cm = colmax[:, 0, :]                                     # (n_par, n)
    cs = colsum[:, 0, :]
    gmax = jnp.max(cm, axis=0)                               # (n,)
    gsum = jnp.sum(cs * jnp.exp(cm - gmax[None, :]), axis=0)
    col_lse = jnp.log(gsum) + gmax
    total = jnp.sum(acc) + jnp.sum(col_lse)
    return total / (2.0 * n)


if __name__ == "__main__":
    key = jax.random.PRNGKey(0)
    # Cases chosen to exercise every static code path:
    #   256 f32 : masked diag, no tail, 2 parallel chunks x 2 accumulation steps
    #   512 bf16: diag-block DMA path, no tail, 2 parallel chunks
    #   240 f32 : masked diag + ragged tail, 2 parallel chunks
    #   576 bf16: diag-block DMA path + ragged tail, single chunk (odd tiles)
    cases = [
        (256, jnp.float32),
        (512, jnp.bfloat16),
        (240, jnp.float32),
        (576, jnp.bfloat16),
    ]
    for i, (n, dtype) in enumerate(cases):
        k = jax.random.fold_in(key, i)
        sims = jax.random.normal(k, (n, n), dtype=jnp.float32).astype(dtype)
        got = jax.block_until_ready(nce_loss(sims, temperature=0.1))
        want = jax.block_until_ready(_nce_loss_ref(sims, temperature=0.1))
        assert jnp.allclose(got, want, rtol=1e-3, atol=3e-3), (n, dtype, got, want)
    print("KERNEL_OK")
</pallas_src>

<mosaic_0001>
module attributes {stable_mosaic.version = 11 : i64} {
  func.func @_nce_kernel(%arg0: i32, %arg1: i32, %arg2: memref<64x256xf32, #tpu.memory_space<vmem>>, %arg3: memref<1x1x1xf32, #tpu.memory_space<vmem>>, %arg4: memref<1x8x256xf32, #tpu.memory_space<vmem>>, %arg5: memref<1x8x256xf32, #tpu.memory_space<vmem>>) attributes {dimension_semantics = [#tpu.dimension_semantics<parallel>, #tpu.dimension_semantics<arbitrary>], iteration_bounds = array<i64: 2, 2>, scalar_prefetch = 0 : i64, scratch_operands = 0 : i64, tpu.core_type = #tpu.core_type<tc>, window_params = [{transform_indices = @transform_0, window_bounds = array<i64: 64, 256>}, {transform_indices = @transform_1, window_bounds = array<i64: 1, 1, 1>}, {transform_indices = @transform_2, window_bounds = array<i64: 1, 8, 256>}, {transform_indices = @transform_3, window_bounds = array<i64: 1, 8, 256>}]} {
    %c2_i32 = arith.constant 2 : i32
    %0 = arith.muli %arg0, %c2_i32 : i32
    %1 = arith.addi %0, %arg1 : i32
    %c64_i32 = arith.constant 64 : i32
    %2 = arith.muli %1, %c64_i32 : i32
    %c0_i32 = arith.constant 0 : i32
    %3 = arith.cmpi eq, %arg1, %c0_i32 : i32
    %4 = arith.extui %3 : i1 to i32
    %c0_i32_0 = arith.constant 0 : i32
    %5 = arith.cmpi ne, %4, %c0_i32_0 : i32
    scf.if %5 {
      %cst_30 = arith.constant 0.000000e+00 : f32
      %79 = vector.broadcast %cst_30 : f32 to vector<1x1xf32>
      %c0_31 = arith.constant 0 : index
      %c0_32 = arith.constant 0 : index
      %c0_33 = arith.constant 0 : index
      %80 = vector.load %arg3[%c0_31, %c0_32, %c0_33] : memref<1x1x1xf32, #tpu.memory_space<vmem>>, vector<1x1x1xf32>
      %81 = vector.shape_cast %80 : vector<1x1x1xf32> to vector<1x1xf32>
      %82 = vector.shape_cast %79 : vector<1x1xf32> to vector<1x1x1xf32>
      tpu.vector_store %arg3[%c0_31, %c0_32, %c0_33], %82 {strides = array<i32>} : memref<1x1x1xf32, #tpu.memory_space<vmem>>, vector<1x1x1xf32>,
      %cst_34 = arith.constant 0xFF800000 : f32
      %83 = vector.broadcast %cst_34 : f32 to vector<8x256xf32>
      %c0_35 = arith.constant 0 : index
      %c0_36 = arith.constant 0 : index
      %c0_37 = arith.constant 0 : index
      %84 = vector.load %arg4[%c0_35, %c0_36, %c0_37] : memref<1x8x256xf32, #tpu.memory_space<vmem>>, vector<1x8x256xf32>
      %85 = vector.shape_cast %84 : vector<1x8x256xf32> to vector<8x256xf32>
      %86 = vector.shape_cast %83 : vector<8x256xf32> to vector<1x8x256xf32>
      tpu.vector_store %arg4[%c0_35, %c0_36, %c0_37], %86 {strides = array<i32>} : memref<1x8x256xf32, #tpu.memory_space<vmem>>, vector<1x8x256xf32>,
      %cst_38 = arith.constant 0.000000e+00 : f32
      %87 = vector.broadcast %cst_38 : f32 to vector<8x256xf32>
      %c0_39 = arith.constant 0 : index
      %c0_40 = arith.constant 0 : index
      %c0_41 = arith.constant 0 : index
      %88 = vector.load %arg5[%c0_39, %c0_40, %c0_41] : memref<1x8x256xf32, #tpu.memory_space<vmem>>, vector<1x8x256xf32>
      %89 = vector.shape_cast %88 : vector<1x8x256xf32> to vector<8x256xf32>
      %90 = vector.shape_cast %87 : vector<8x256xf32> to vector<1x8x256xf32>
      tpu.vector_store %arg5[%c0_39, %c0_40, %c0_41], %90 {strides = array<i32>} : memref<1x8x256xf32, #tpu.memory_space<vmem>>, vector<1x8x256xf32>,
    } else {
    }
    %c0 = arith.constant 0 : index
    %c0_1 = arith.constant 0 : index
    %6 = vector.load %arg2[%c0, %c0_1] : memref<64x256xf32, #tpu.memory_space<vmem>>, vector<64x256xf32>
    %cst = arith.constant 1.000000e+01 : f32
    %7 = vector.broadcast %cst : f32 to vector<64x256xf32>
    %8 = arith.mulf %6, %7 : vector<64x256xf32>
    %cst_2 = arith.constant dense<0xFF800000> : vector<64xf32>
    %9 = vector.multi_reduction <maximumf>, %8, %cst_2 [1] : vector<64x256xf32> to vector<64xf32>
    %10 = vector.shape_cast %9 : vector<64xf32> to vector<64x1xf32>
    %11 = vector.broadcast %10 : vector<64x1xf32> to vector<64x256xf32>
    %12 = arith.subf %8, %11 : vector<64x256xf32>
    %13 = math.exp %12 : vector<64x256xf32>
    %cst_3 = arith.constant dense<0.000000e+00> : vector<64xf32>
    %14 = vector.multi_reduction <add>, %13, %cst_3 [1] : vector<64x256xf32> to vector<64xf32>
    %15 = vector.shape_cast %14 : vector<64xf32> to vector<64x1xf32>
    %16 = math.log %15 : vector<64x1xf32>
    %17 = arith.addf %16, %10 : vector<64x1xf32>
    %cst_4 = arith.constant dense<0xFF800000> : vector<1xf32>
    %18 = vector.multi_reduction <maximumf>, %10, %cst_4 [0] : vector<64x1xf32> to vector<1xf32>
    %19 = vector.shape_cast %18 : vector<1xf32> to vector<1x1xf32>
    %20 = vector.broadcast %19 : vector<1x1xf32> to vector<64x1xf32>
    %21 = arith.subf %10, %20 : vector<64x1xf32>
    %22 = math.exp %21 : vector<64x1xf32>
    %23 = vector.broadcast %22 : vector<64x1xf32> to vector<64x256xf32>
    %24 = arith.mulf %13, %23 : vector<64x256xf32>
    %cst_5 = arith.constant 1.000000e+00 : bf16
    %25 = vector.broadcast %cst_5 : bf16 to vector<8x64xbf16>
    %26 = arith.truncf %24 : vector<64x256xf32> to vector<64x256xbf16>
    %cst_6 = arith.constant dense<0.000000e+00> : vector<8x256xf32>
    %27 = tpu.matmul %25, %26, %cst_6 {dimension_numbers = #tpu.dot_dimension_numbers<[1], [0], [0], [1], [0, 0, 1, 1], [], []>} : vector<8x64xbf16>, vector<64x256xbf16>, vector<8x256xf32> -> vector<8x256xf32>
    %cst_7 = arith.constant dense<0xFF800000> : vector<256xf32>
    %28 = vector.multi_reduction <maximumf>, %8, %cst_7 [0] : vector<64x256xf32> to vector<256xf32>
    %29 = vector.shape_cast %28 : vector<256xf32> to vector<1x256xf32>
    %c0_8 = arith.constant 0 : index
    %c0_9 = arith.constant 0 : index
    %c0_10 = arith.constant 0 : index
    %30 = vector.load %arg4[%c0_8, %c0_9, %c0_10] : memref<1x8x256xf32, #tpu.memory_space<vmem>>, vector<1x8x256xf32>
    %31 = vector.shape_cast %30 : vector<1x8x256xf32> to vector<8x256xf32>
    %32 = vector.broadcast %29 : vector<1x256xf32> to vector<8x256xf32>
    %33 = arith.maximumf %31, %32 : vector<8x256xf32>
    %34 = math.log %27 : vector<8x256xf32>
    %35 = vector.broadcast %19 : vector<1x1xf32> to vector<8x256xf32>
    %36 = arith.subf %35, %33 : vector<8x256xf32>
    %37 = arith.addf %34, %36 : vector<8x256xf32>
    %38 = math.exp %37 : vector<8x256xf32>
    %c0_11 = arith.constant 0 : index
    %c0_12 = arith.constant 0 : index
    %c0_13 = arith.constant 0 : index
    %39 = vector.load %arg5[%c0_11, %c0_12, %c0_13] : memref<1x8x256xf32, #tpu.memory_space<vmem>>, vector<1x8x256xf32>
    %40 = vector.shape_cast %39 : vector<1x8x256xf32> to vector<8x256xf32>
    %41 = arith.subf %31, %33 : vector<8x256xf32>
    %42 = math.exp %41 : vector<8x256xf32>
    %43 = arith.mulf %40, %42 : vector<8x256xf32>
    %44 = arith.addf %43, %38 : vector<8x256xf32>
    %c0_14 = arith.constant 0 : index
    %c0_15 = arith.constant 0 : index
    %c0_16 = arith.constant 0 : index
    %45 = vector.load %arg5[%c0_14, %c0_15, %c0_16] : memref<1x8x256xf32, #tpu.memory_space<vmem>>, vector<1x8x256xf32>
    %46 = vector.shape_cast %45 : vector<1x8x256xf32> to vector<8x256xf32>
    %47 = vector.shape_cast %44 : vector<8x256xf32> to vector<1x8x256xf32>
    tpu.vector_store %arg5[%c0_14, %c0_15, %c0_16], %47 {strides = array<i32>} : memref<1x8x256xf32, #tpu.memory_space<vmem>>, vector<1x8x256xf32>,
    %c0_17 = arith.constant 0 : index
    %c0_18 = arith.constant 0 : index
    %c0_19 = arith.constant 0 : index
    %48 = vector.load %arg4[%c0_17, %c0_18, %c0_19] : memref<1x8x256xf32, #tpu.memory_space<vmem>>, vector<1x8x256xf32>
    %49 = vector.shape_cast %48 : vector<1x8x256xf32> to vector<8x256xf32>
    %50 = vector.shape_cast %33 : vector<8x256xf32> to vector<1x8x256xf32>
    tpu.vector_store %arg4[%c0_17, %c0_18, %c0_19], %50 {strides = array<i32>} : memref<1x8x256xf32, #tpu.memory_space<vmem>>, vector<1x8x256xf32>,
    %51 = tpu.iota {dimensions = array<i32: 1>} : vector<1x256xi32>
    %52 = tpu.iota {dimensions = array<i32: 0>} : vector<64x1xi32>
    %53 = vector.broadcast %2 : i32 to vector<64x1xi32>
    %54 = arith.addi %53, %52 : vector<64x1xi32>
    %55 = vector.broadcast %51 : vector<1x256xi32> to vector<64x256xi32>
    %56 = vector.broadcast %54 : vector<64x1xi32> to vector<64x256xi32>
    %57 = arith.cmpi eq, %55, %56 : vector<64x256xi32>
    %cst_20 = arith.constant 0.000000e+00 : f32
    %58 = vector.broadcast %cst_20 : f32 to vector<64x256xf32>
    %59 = arith.select %57, %8, %58 : vector<64x256xi1>, vector<64x256xf32>
    %60 = vector.shape_cast %59 : vector<64x256xf32> to vector<1x64x256xf32>
    %cst_21 = arith.constant dense<0.000000e+00> : vector<1xf32>
    %61 = vector.multi_reduction <add>, %60, %cst_21 [1, 2] : vector<1x64x256xf32> to vector<1xf32>
    %62 = vector.shape_cast %61 : vector<1xf32> to vector<1x1x1xf32>
    %63 = vector.extract %62[0, 0, 0] : f32 from vector<1x1x1xf32>
    %64 = vector.broadcast %63 : f32 to vector<1x1xf32>
    %c0_22 = arith.constant 0 : index
    %c0_23 = arith.constant 0 : index
    %c0_24 = arith.constant 0 : index
    %65 = vector.load %arg3[%c0_22, %c0_23, %c0_24] : memref<1x1x1xf32, #tpu.memory_space<vmem>>, vector<1x1x1xf32>
    %66 = vector.shape_cast %65 : vector<1x1x1xf32> to vector<1x1xf32>
    %67 = vector.shape_cast %17 : vector<64x1xf32> to vector<1x64x1xf32>
    %cst_25 = arith.constant dense<0.000000e+00> : vector<1xf32>
    %68 = vector.multi_reduction <add>, %67, %cst_25 [1, 2] : vector<1x64x1xf32> to vector<1xf32>
    %69 = vector.shape_cast %68 : vector<1xf32> to vector<1x1x1xf32>
    %70 = vector.extract %69[0, 0, 0] : f32 from vector<1x1x1xf32>
    %71 = vector.broadcast %70 : f32 to vector<1x1xf32>
    %cst_26 = arith.constant 2.000000e+00 : f32
    %72 = vector.broadcast %cst_26 : f32 to vector<1x1xf32>
    %73 = arith.mulf %72, %64 : vector<1x1xf32>
    %74 = arith.subf %71, %73 : vector<1x1xf32>
    %75 = arith.addf %66, %74 : vector<1x1xf32>
    %c0_27 = arith.constant 0 : index
    %c0_28 = arith.constant 0 : index
    %c0_29 = arith.constant 0 : index
    %76 = vector.load %arg3[%c0_27, %c0_28, %c0_29] : memref<1x1x1xf32, #tpu.memory_space<vmem>>, vector<1x1x1xf32>
    %77 = vector.shape_cast %76 : vector<1x1x1xf32> to vector<1x1xf32>
    %78 = vector.shape_cast %75 : vector<1x1xf32> to vector<1x1x1xf32>
    tpu.vector_store %arg3[%c0_27, %c0_28, %c0_29], %78 {strides = array<i32>} : memref<1x1x1xf32, #tpu.memory_space<vmem>>, vector<1x1x1xf32>,
    return
  }
  func.func @transform_0(%arg0: i32, %arg1: i32) -> (i32, i32) {
    %c2_i32 = arith.constant 2 : i32
    %0 = arith.muli %arg0, %c2_i32 : i32
    %1 = arith.addi %0, %arg1 : i32
    %c0_i32 = arith.constant 0 : i32
    %c0_i32_0 = arith.constant 0 : i32
    return %1, %c0_i32 : i32, i32
  }
  func.func @transform_1(%arg0: i32, %arg1: i32) -> (i32, i32, i32) {
    %c0_i32 = arith.constant 0 : i32
    %c0_i32_0 = arith.constant 0 : i32
    %c0_i32_1 = arith.constant 0 : i32
    return %arg0, %c0_i32, %c0_i32_0 : i32, i32, i32
  }
  func.func @transform_2(%arg0: i32, %arg1: i32) -> (i32, i32, i32) {
    %c0_i32 = arith.constant 0 : i32
    %c0_i32_0 = arith.constant 0 : i32
    %c0_i32_1 = arith.constant 0 : i32
    return %arg0, %c0_i32, %c0_i32_0 : i32, i32, i32
  }
  func.func @transform_3(%arg0: i32, %arg1: i32) -> (i32, i32, i32) {
    %c0_i32 = arith.constant 0 : i32
    %c0_i32_0 = arith.constant 0 : i32
    %c0_i32_1 = arith.constant 0 : i32
    return %arg0, %c0_i32, %c0_i32_0 : i32, i32, i32
  }
}

</mosaic_0001>

<llo_original>
// kernel: tpu_custom_call.1
$region0: #{tpu_custom_call.1}
  #allocation0 [shape = 'u32[]', space=smem, size = 0x4, offset = 0x4, fixed_abs, tag = 'smem constant byte address 0x4 - core index']
  #allocation1 [shape = 'u32[144,128]{1,0:T(1,128)}', space=vmem, size = 0x12000, scoped, tag = 'internal scratch']
  %s0 = inlined_call_operand.hbm [shape: f32[256,256], index: 0, kind: input, shape index: {}]
  %s1 = inlined_call_operand.vmem [shape: f32[2,1,1], index: 1, kind: output, shape index: {0}]
  %s2 = inlined_call_operand.hbm [shape: f32[2,8,256], index: 2, kind: output, shape index: {1}]
  %s3 = inlined_call_operand.hbm [shape: f32[2,8,256], index: 3, kind: output, shape index: {2}]
  %4 = xla_tuple %s1, %s2, %s3
  %s5 = sld [smem:[#allocation0]]
  $region61: #{tpu_custom_call.1} parent=0
    _
  %s7 = ssub.s32 1, %s5
  %s8 = scalar_select 0, %s7, %s5
  $region1: #{tpu_custom_call.1} parent=0
    #allocation2 [shape = 'u8[131072]{0}', space=vmem, size = 0x20000, scoped, tag = 'input window, operand 0']
    #allocation3 [shape = 's32[2]{0}', space=sflag, size = 0x8, scoped, tag = 'scoped memory for tpu_custom_call.1']
    #allocation4 [shape = 's32[2]{0}', space=sflag, size = 0x8, scoped, tag = 'scoped memory for tpu_custom_call.1']
    #allocation5 [shape = 'u8[16384]{0}', space=vmem, size = 0x4000, scoped, tag = 'output window, operand 1']
    #allocation6 [shape = 'u8[16384]{0}', space=vmem, size = 0x4000, scoped, tag = 'output window, operand 2']
    #allocation7 [shape = 's32[2]{0}', space=sflag, size = 0x8, scoped, tag = 'scoped memory for tpu_custom_call.1']
    %9 = vsyncpa [#allocation3], 0
    %s10 = scalar_lea.sflag [#allocation3], 1
    %11 = vsyncpa %s10, 0
    %12 = vsyncpa [#allocation4], 0
    %s13 = scalar_lea.sflag [#allocation4], 1
    %14 = vsyncpa %s13, 0
    %15 = vsyncpa [#allocation7], 0
    %s16 = scalar_lea.sflag [#allocation7], 1
    %17 = vsyncpa %s16, 0
    loop: start=0, step=1, limit=6
    $region2: #{tpu_custom_call.1} parent=1 // loop_pre_header
      _
    $region3: #{tpu_custom_call.1} parent=1 // loop_header
      %s19 = sphi 0, %s23
      %p20 = scmp.ge.s32.totalorder %s19, 6
      %s26 = sphi 0, %s38
      %s27 = sphi 0, %s34
      %s28 = sphi 0, %s26
      %s29 = sphi 0, %s27
      %s30 = sphi 0, %s28
      %s31 = sphi 0, %s29
      %s45 = sphi 0, %s47
      %s48 = sphi 0, %s45
      %s49 = sphi 0, %s48
      %s65 = sphi 0, %s49
      %s71 = sphi 0, %s73
      %s74 = sphi 0, %s71
      %s75 = sphi 0, %s74
      %s91 = sphi 0, %s75
      %s97 = sphi 0, %s99
      %s100 = sphi 0, %s97
      %s101 = sphi 0, %s100
      %s117 = sphi 0, %s101
      %s123 = sphi 0, %s125
      %s126 = sphi 0, %s123
      %s127 = sphi 0, %s126
      %s143 = sphi 0, %s127
    $region4: #{tpu_custom_call.1} parent=1 // loop_header_branch
      %22 = sbr.rel (%p20) target = $region8
    $region5: #{tpu_custom_call.1} parent=1 // loop_body
      %s24 = ssub.s32 %s19, 1
      %s25 = ssub.s32 %s19, 2
      %s32 = sadd.s32 1, %s27
      %p33 = scmp.ge.s32.totalorder %s32, 2
      %s34 = scalar_select %p33, 0, %s32
      %s35 = sadd.s32 1, %s26
      %s36 = scalar_select %p33, %s35, %s26
      %p37 = scmp.ge.s32.totalorder %s36, 2
      %s38 = scalar_select %p37, 0, %s36
      %s39 = smul.u32 %s26, 2
      %s40 = sadd.s32 %s39, %s27
      %s41 = smul.u32 %s38, 2
      %s42 = sadd.s32 %s41, %s34
      %s43 = ssub.s32 %s40, %s42
      %p44 = scmp.eq.s32.totalorder %s43, 0
      %s46 = sadd.s32 %s45, 1
      %s47 = scalar_select %p44, %s45, %s46
      %p50 = pneg %p44
      %p51 = scmp.eq.s32.totalorder %s19, 3
      %p52 = por %p50, %p51
      %p53 = scmp.ne.s32.totalorder %s45, %s48
      %p54 = scmp.eq.s32.totalorder %s19, 0
      %p55 = por %p53, %p54
      %p56 = scmp.ne.s32.totalorder %s45, %s48
      %p57 = scmp.eq.s32.totalorder %s24, 3
      %p58 = por %p56, %p57
      %p59 = scmp.ne.s32.totalorder %s48, %s49
      %p60 = scmp.eq.s32.totalorder %s24, 0
      %p61 = por %p59, %p60
      %p62 = scmp.ne.s32.totalorder %s48, %s49
      %p63 = scmp.eq.s32.totalorder %s25, 3
      %p64 = por %p62, %p63
      %p66 = scmp.ne.s32.totalorder %s49, %s65
      %p67 = scmp.eq.s32.totalorder %s25, 0
      %p68 = por %p66, %p67
      %s69 = ssub.s32 %s26, %s38
      %p70 = scmp.eq.s32.totalorder %s69, 0
      %s72 = sadd.s32 %s71, 1
      %s73 = scalar_select %p70, %s71, %s72
      %p76 = pneg %p70
      %p77 = scmp.eq.s32.totalorder %s19, 3
      %p78 = por %p76, %p77
      %p79 = scmp.ne.s32.totalorder %s71, %s74
      %p80 = scmp.eq.s32.totalorder %s19, 0
      %p81 = por %p79, %p80
      %p82 = scmp.ne.s32.totalorder %s71, %s74
      %p83 = scmp.eq.s32.totalorder %s24, 3
      %p84 = por %p82, %p83
      %p85 = scmp.ne.s32.totalorder %s74, %s75
      %p86 = scmp.eq.s32.totalorder %s24, 0
      %p87 = por %p85, %p86
      %p88 = scmp.ne.s32.totalorder %s74, %s75
      %p89 = scmp.eq.s32.totalorder %s25, 3
      %p90 = por %p88, %p89
      %p92 = scmp.ne.s32.totalorder %s75, %s91
      %p93 = scmp.eq.s32.totalorder %s25, 0
      %p94 = por %p92, %p93
      %s95 = ssub.s32 %s26, %s38
      %p96 = scmp.eq.s32.totalorder %s95, 0
      %s98 = sadd.s32 %s97, 1
      %s99 = scalar_select %p96, %s97, %s98
      %p102 = pneg %p96
      %p103 = scmp.eq.s32.totalorder %s19, 3
      %p104 = por %p102, %p103
      %p105 = scmp.ne.s32.totalorder %s97, %s100
      %p106 = scmp.eq.s32.totalorder %s19, 0
      %p107 = por %p105, %p106
      %p108 = scmp.ne.s32.totalorder %s97, %s100
      %p109 = scmp.eq.s32.totalorder %s24, 3
      %p110 = por %p108, %p109
      %p111 = scmp.ne.s32.totalorder %s100, %s101
      %p112 = scmp.eq.s32.totalorder %s24, 0
      %p113 = por %p111, %p112
      %p114 = scmp.ne.s32.totalorder %s100, %s101
      %p115 = scmp.eq.s32.totalorder %s25, 3
      %p116 = por %p114, %p115
      %p118 = scmp.ne.s32.totalorder %s101, %s117
      %p119 = scmp.eq.s32.totalorder %s25, 0
      %p120 = por %p118, %p119
      %s121 = ssub.s32 %s26, %s38
      %p122 = scmp.eq.s32.totalorder %s121, 0
      %s124 = sadd.s32 %s123, 1
      %s125 = scalar_select %p122, %s123, %s124
      %p128 = pneg %p122
      %p129 = scmp.eq.s32.totalorder %s19, 3
      %p130 = por %p128, %p129
      %p131 = scmp.ne.s32.totalorder %s123, %s126
      %p132 = scmp.eq.s32.totalorder %s19, 0
      %p133 = por %p131, %p132
      %p134 = scmp.ne.s32.totalorder %s123, %s126
      %p135 = scmp.eq.s32.totalorder %s24, 3
      %p136 = por %p134, %p135
      %p137 = scmp.ne.s32.totalorder %s126, %s127
      %p138 = scmp.eq.s32.totalorder %s24, 0
      %p139 = por %p137, %p138
      %p140 = scmp.ne.s32.totalorder %s126, %s127
      %p141 = scmp.eq.s32.totalorder %s25, 3
      %p142 = por %p140, %p141
      %p144 = scmp.ne.s32.totalorder %s127, %s143
      %p145 = scmp.eq.s32.totalorder %s25, 0
      %p146 = por %p144, %p145
      %p147 = scmp.le.s32.totalorder 1, %s19
      %p148 = scmp.lt.s32.totalorder %s19, 5
      %p149 = pnand %p147, %p148
      %p150 = pneg %p149
      // Predicated region
      $region9: #{tpu_custom_call.1} parent=5 // pred_check
        _
      $region10: #{tpu_custom_call.1} parent=5 // pred_check_branch
        %152 = sbr.rel (%p149) target = $region12
      $region11: #{tpu_custom_call.1} parent=5 // pred_region
        %s153 = ssub.s32 %s19, 1
      $region12: #{tpu_custom_call.1} parent=5 // pred_fallthru
        _
      %p154 = scmp.lt.s32.totalorder %s19, 4
      // Predicated region
      $region13: #{tpu_custom_call.1} parent=5 // pred_check
        %p155 = pneg %p154
      $region14: #{tpu_custom_call.1} parent=5 // pred_check_branch
        %157 = sbr.rel (%p155) target = $region16
      $region15: #{tpu_custom_call.1} parent=5 // pred_region
        // Predicated region
        $region17: #{tpu_custom_call.1} parent=15 // pred_check
          %p158 = pneg %p55
        $region18: #{tpu_custom_call.1} parent=15 // pred_check_branch
          %160 = sbr.rel (%p158) target = $region20
        $region19: #{tpu_custom_call.1} parent=15 // pred_region
          %s161 = sand.u32 %s45, 1
          %s162 = scalar_lea.sflag [#allocation3], %s161
          %s163 = sand.u32 %s45, 1
          %s164 = smul.addr %s163, 128
          %s165 = scalar_lea.vmem [#allocation2], %s164
          %s166 = smul.u32 %s26, 2
          %s167 = sadd.s32 %s166, %s27
          %s168 = smul.u32 8, %s167
          %s170 = ssub.s32 2048, 2048
          %171 = vsyncadd %s162, %s170
          %s172 = smul.addr %s168, 2
          %s173 = smul.addr %s172, 128
          %s174 = scalar_lea.hbm %s0, %s173
          %s175 = sshll.u32 %s165, 4
          %s176 = int_to_ptr.vmem [resolvable:$true] %s175
          %181 = dma.hbm_to_vmem [thread:$0]  %s174, 2048, %s176, %s162, 256, 256, 16
        $region20: #{tpu_custom_call.1} parent=15 // pred_fallthru
          _
      $region16: #{tpu_custom_call.1} parent=5 // pred_fallthru
        _
      %p182 = scmp.le.s32.totalorder 1, %s19
      %p183 = scmp.lt.s32.totalorder %s19, 5
      %p184 = pnand %p182, %p183
      %p185 = pneg %p184
      // Predicated region
      $region21: #{tpu_custom_call.1} parent=5 // pred_check
        _
      $region22: #{tpu_custom_call.1} parent=5 // pred_check_branch
        %187 = sbr.rel (%p184) target = $region24
      $region23: #{tpu_custom_call.1} parent=5 // pred_region
        %s188 = ssub.s32 %s19, 1
        %s189 = sand.u32 %s48, 1
        %s190 = scalar_lea.sflag [#allocation3], %s189
        %s191 = sand.u32 %s48, 1
        %s192 = smul.addr %s191, 128
        %s193 = scalar_lea.vmem [#allocation2], %s192
        // Predicated region
        $region25: #{tpu_custom_call.1} parent=23 // pred_check
          %p194 = pneg %p61
        $region26: #{tpu_custom_call.1} parent=23 // pred_check_branch
          %196 = sbr.rel (%p194) target = $region28
        $region27: #{tpu_custom_call.1} parent=23 // pred_region
          %197 = dma.done %s190, 2048
        $region28: #{tpu_custom_call.1} parent=23 // pred_fallthru
          _
        %s198 = sand.u32 %s48, 1
        %s199 = scalar_lea.sflag [#allocation3], %s198
        %s200 = sand.u32 %s48, 1
        %s201 = smul.addr %s200, 128
        %s202 = scalar_lea.vmem [#allocation2], %s201
        %p203 = pneg %p61
        %p204 = pneg %p58
        %p205 = pneg %p87
        %p206 = pneg %p84
        %p207 = scmp.lt.s32.totalorder %s28, 1
        %s208 = scalar_select %p207, %s28, 1
        %s209 = scalar_lea.vmem %s1, %s208
        %p210 = pneg %p113
        %p211 = pneg %p110
        %s212 = sand.u32 %s100, 1
        %s213 = scalar_lea.sflag [#allocation4], %s212
        %s214 = sand.u32 %s100, 1
        %s215 = smul.addr %s214, 16
        %s216 = scalar_lea.vmem [#allocation5], %s215
        %p217 = pneg %p139
        %p218 = pneg %p136
        %s219 = sand.u32 %s126, 1
        %s220 = scalar_lea.sflag [#allocation7], %s219
        %s221 = sand.u32 %s126, 1
        %s222 = smul.addr %s221, 16
        %s223 = scalar_lea.vmem [#allocation6], %s222
        %s224 = smul.u32 %s28, 2
        %s225 = sadd.s32 %s224, %s29
        %s226 = smul.u32 8, %s225
        %p227 = scmp.lt.s32.totalorder %s28, 1
        %s228 = scalar_select %p227, %s28, 1
        %s229 = scalar_lea.vmem %s1, %s228
        %s232 = smul.u32 %s28, 2
        %s233 = sadd.s32 %s232, %s29
        %s234 = smul.u32 %s233, 64
        %p235 = scmp.eq.s32.totalorder %s29, 0
        // Predicated region
        $region29: #{tpu_custom_call.1} parent=23 // pred_check
          %p236 = pneg %p235
        $region30: #{tpu_custom_call.1} parent=23 // pred_check_branch
          %238 = sbr.rel (%p236) target = $region32
        $region31: #{tpu_custom_call.1} parent=23 // pred_region
          %vm239 = vcmask 0
          %240 = vst.msk [vmem:[%s229] sm:$0x1] %vm239, 0.0
          %241 = vst [vmem:[%s216] sm:$0xff] -inf
          %242 = vst [vmem:[%s216 + $0x8] sm:$0xff] -inf
          %243 = vst [vmem:[%s223] sm:$0xff] 0.0
          %244 = vst [vmem:[%s223 + $0x8] sm:$0xff] 0.0
        $region32: #{tpu_custom_call.1} parent=23 // pred_fallthru
          _
        %v245 = vld [vmem:[%s193] sm:$0xff]
        %v246 = vld [vmem:[%s193 + $0x8] sm:$0xff]
        %v247 = vld [vmem:[%s193 + $0x10] sm:$0xff]
        %v248 = vld [vmem:[%s193 + $0x18] sm:$0xff]
        %v249 = vld [vmem:[%s193 + $0x20] sm:$0xff]
        %v250 = vld [vmem:[%s193 + $0x28] sm:$0xff]
        %v251 = vld [vmem:[%s193 + $0x30] sm:$0xff]
        %v252 = vld [vmem:[%s193 + $0x38] sm:$0xff]
        %v253 = vld [vmem:[%s193 + $0x40] sm:$0xff]
        %v254 = vld [vmem:[%s193 + $0x48] sm:$0xff]
        %v255 = vld [vmem:[%s193 + $0x50] sm:$0xff]
        %v256 = vld [vmem:[%s193 + $0x58] sm:$0xff]
        %v257 = vld [vmem:[%s193 + $0x60] sm:$0xff]
        %v258 = vld [vmem:[%s193 + $0x68] sm:$0xff]
        %v259 = vld [vmem:[%s193 + $0x70] sm:$0xff]
        %v260 = vld [vmem:[%s193 + $0x78] sm:$0xff]
        %v261 = vmul.f32 %v245, 10.0
        %v262 = vmul.f32 %v246, 10.0
        %v263 = vmul.f32 %v247, 10.0
        %v264 = vmul.f32 %v248, 10.0
        %v265 = vmul.f32 %v249, 10.0
        %v266 = vmul.f32 %v250, 10.0
        %v267 = vmul.f32 %v251, 10.0
        %v268 = vmul.f32 %v252, 10.0
        %v269 = vmul.f32 %v253, 10.0
        %v270 = vmul.f32 %v254, 10.0
        %v271 = vmul.f32 %v255, 10.0
        %v272 = vmul.f32 %v256, 10.0
        %v273 = vmul.f32 %v257, 10.0
        %v274 = vmul.f32 %v258, 10.0
        %v275 = vmul.f32 %v259, 10.0
        %v276 = vmul.f32 %v260, 10.0
        %v277 = vmax.f32 %v261, %v262
        %278 = vmax.xlane.f32.xlu0 %v277
        %v279 = vpop.xlane.xlu0 %278
        %v280 = vmax.f32 %v263, %v264
        %281 = vmax.xlane.f32.xlu0 %v280
        %v282 = vpop.xlane.xlu0 %281
        %v283 = vmax.f32 %v265, %v266
        %284 = vmax.xlane.f32.xlu0 %v283
        %v285 = vpop.xlane.xlu0 %284
        %v286 = vmax.f32 %v267, %v268
        %287 = vmax.xlane.f32.xlu0 %v286
        %v288 = vpop.xlane.xlu0 %287
        %v289 = vmax.f32 %v269, %v270
        %290 = vmax.xlane.f32.xlu0 %v289
        %v291 = vpop.xlane.xlu0 %290
        %v292 = vmax.f32 %v271, %v272
        %293 = vmax.xlane.f32.xlu0 %v292
        %v294 = vpop.xlane.xlu0 %293
        %v295 = vmax.f32 %v273, %v274
        %296 = vmax.xlane.f32.xlu0 %v295
        %v297 = vpop.xlane.xlu0 %296
        %v298 = vmax.f32 %v275, %v276
        %299 = vmax.xlane.f32.xlu0 %v298
        %v300 = vpop.xlane.xlu0 %299
        %v301 = vsub.f32 %v261, %v279
        %v302 = vsub.f32 %v262, %v279
        %v303 = vsub.f32 %v263, %v282
        %v304 = vsub.f32 %v264, %v282
        %v305 = vsub.f32 %v265, %v285
        %v306 = vsub.f32 %v266, %v285
        %v307 = vsub.f32 %v267, %v288
        %v308 = vsub.f32 %v268, %v288
        %v309 = vsub.f32 %v269, %v291
        %v310 = vsub.f32 %v270, %v291
        %v311 = vsub.f32 %v271, %v294
        %v312 = vsub.f32 %v272, %v294
        %v313 = vsub.f32 %v273, %v297
        %v314 = vsub.f32 %v274, %v297
        %v315 = vsub.f32 %v275, %v300
        %v316 = vsub.f32 %v276, %v300
        %v317 = vmul.f32 %v301, 1.442695
        %v318 = vpow.pop %v317
        %v319 = vmul.f32 %v302, 1.442695
        %v320 = vpow.pop %v319
        %v321 = vmul.f32 %v303, 1.442695
        %v322 = vpow.pop %v321
        %v323 = vmul.f32 %v304, 1.442695
        %v324 = vpow.pop %v323
        %v325 = vmul.f32 %v305, 1.442695
        %v326 = vpow.pop %v325
        %v327 = vmul.f32 %v306, 1.442695
        %v328 = vpow.pop %v327
        %v329 = vmul.f32 %v307, 1.442695
        %v330 = vpow.pop %v329
        %v331 = vmul.f32 %v308, 1.442695
        %v332 = vpow.pop %v331
        %v333 = vmul.f32 %v309, 1.442695
        %v334 = vpow.pop %v333
        %v335 = vmul.f32 %v310, 1.442695
        %v336 = vpow.pop %v335
        %v337 = vmul.f32 %v311, 1.442695
        %v338 = vpow.pop %v337
        %v339 = vmul.f32 %v312, 1.442695
        %v340 = vpow.pop %v339
        %v341 = vmul.f32 %v313, 1.442695
        %v342 = vpow.pop %v341
        %v343 = vmul.f32 %v314, 1.442695
        %v344 = vpow.pop %v343
        %v345 = vmul.f32 %v315, 1.442695
        %v346 = vpow.pop %v345
        %v347 = vmul.f32 %v316, 1.442695
        %v348 = vpow.pop %v347
        %v349 = vadd.f32 %v318, %v320
        %350 = vadd.xlane.f32.xlu0 %v349
        %v351 = vpop.xlane.xlu0 %350
        %v352 = vadd.f32 %v322, %v324
        %353 = vadd.xlane.f32.xlu0 %v352
        %v354 = vpop.xlane.xlu0 %353
        %v355 = vadd.f32 %v326, %v328
        %356 = vadd.xlane.f32.xlu0 %v355
        %v357 = vpop.xlane.xlu0 %356
        %v358 = vadd.f32 %v330, %v332
        %359 = vadd.xlane.f32.xlu0 %v358
        %v360 = vpop.xlane.xlu0 %359
        %v361 = vadd.f32 %v334, %v336
        %362 = vadd.xlane.f32.xlu0 %v361
        %v363 = vpop.xlane.xlu0 %362
        %v364 = vadd.f32 %v338, %v340
        %365 = vadd.xlane.f32.xlu0 %v364
        %v366 = vpop.xlane.xlu0 %365
        %v367 = vadd.f32 %v342, %v344
        %368 = vadd.xlane.f32.xlu0 %v367
        %v369 = vpop.xlane.xlu0 %368
        %v370 = vadd.f32 %v346, %v348
        %371 = vadd.xlane.f32.xlu0 %v370
        %v372 = vpop.xlane.xlu0 %371
        %v373 = vlog2.pop %v351
        %v374 = vmul.f32 %v373, 0.6931472
        %v375 = vlog2.pop %v354
        %v376 = vmul.f32 %v375, 0.6931472
        %v377 = vlog2.pop %v357
        %v378 = vmul.f32 %v377, 0.6931472
        %v379 = vlog2.pop %v360
        %v380 = vmul.f32 %v379, 0.6931472
        %v381 = vlog2.pop %v363
        %v382 = vmul.f32 %v381, 0.6931472
        %v383 = vlog2.pop %v366
        %v384 = vmul.f32 %v383, 0.6931472
        %v385 = vlog2.pop %v369
        %v386 = vmul.f32 %v385, 0.6931472
        %v387 = vlog2.pop %v372
        %v388 = vmul.f32 %v387, 0.6931472
        %v389 = vadd.f32 %v374, %v279
        %v390 = vadd.f32 %v376, %v282
        %v391 = vadd.f32 %v378, %v285
        %v392 = vadd.f32 %v380, %v288
        %v393 = vadd.f32 %v382, %v291
        %v394 = vadd.f32 %v384, %v294
        %v395 = vadd.f32 %v386, %v297
        %v396 = vadd.f32 %v388, %v300
        %v397 = vmax.f32 %v279, %v291
        %v398 = vmax.f32 %v282, %v294
        %v399 = vmax.f32 %v285, %v297
        %v400 = vmax.f32 %v288, %v300
        %v401 = vmax.f32 %v397, %v398
        %v402 = vmax.f32 %v399, %v400
        %v403 = vmax.f32 %v401, %v402
        %v404 = vrot.slane %v403, 4
        %v405 = vmax.f32 %v403, %v404
        %v406 = vrot.slane %v405, 2
        %v407 = vmax.f32 %v405, %v406
        %v408 = vrot.slane %v407, 1
        %v409 = vmax.f32 %v407, %v408
        %v410 = vsub.f32 %v279, %v409
        %v411 = vsub.f32 %v282, %v409
        %v412 = vsub.f32 %v285, %v409
        %v413 = vsub.f32 %v288, %v409
        %v414 = vsub.f32 %v291, %v409
        %v415 = vsub.f32 %v294, %v409
        %v416 = vsub.f32 %v297, %v409
        %v417 = vsub.f32 %v300, %v409
        %v418 = vmul.f32 %v410, 1.442695
        %v419 = vpow.pop %v418
        %v420 = vmul.f32 %v411, 1.442695
        %v421 = vpow.pop %v420
        %v422 = vmul.f32 %v412, 1.442695
        %v423 = vpow.pop %v422
        %v424 = vmul.f32 %v413, 1.442695
        %v425 = vpow.pop %v424
        %v426 = vmul.f32 %v414, 1.442695
        %v427 = vpow.pop %v426
        %v428 = vmul.f32 %v415, 1.442695
        %v429 = vpow.pop %v428
        %v430 = vmul.f32 %v416, 1.442695
        %v431 = vpow.pop %v430
        %v432 = vmul.f32 %v417, 1.442695
        %v433 = vpow.pop %v432
        %v434 = vmul.f32 %v318, %v419
        %v435 = vmul.f32 %v320, %v419
        %v436 = vmul.f32 %v322, %v421
        %v437 = vmul.f32 %v324, %v421
        %v438 = vmul.f32 %v326, %v423
        %v439 = vmul.f32 %v328, %v423
        %v440 = vmul.f32 %v330, %v425
        %v441 = vmul.f32 %v332, %v425
        %v442 = vmul.f32 %v334, %v427
        %v443 = vmul.f32 %v336, %v427
        %v444 = vmul.f32 %v338, %v429
        %v445 = vmul.f32 %v340, %v429
        %v446 = vmul.f32 %v342, %v431
        %v447 = vmul.f32 %v344, %v431
        %v448 = vmul.f32 %v346, %v433
        %v449 = vmul.f32 %v348, %v433
        %v450 = vpack.c.bf16 %v436, %v434
        %v451 = vpack.c.bf16 %v437, %v435
        %v452 = vpack.c.bf16 %v440, %v438
        %v453 = vpack.c.bf16 %v441, %v439
        %v454 = vpack.c.bf16 %v444, %v442
        %v455 = vpack.c.bf16 %v445, %v443
        %v456 = vpack.c.bf16 %v448, %v446
        %v457 = vpack.c.bf16 %v449, %v447
        %vm458 = vcmask 523264
        %v460 = vsel %vm458, 1065369472, 0
        %462 = vmatprep.subr.bf16.mxu0 %v451
        %463 = vmatpush1.bf16.msra.mxu0 %v450
        %464 = vmatprep.subr.bf16.mxu0 %v453
        %465 = vmatpush1.bf16.msra.mxu0 %v452
        %466 = vmatprep.subr.bf16.mxu0 %v455
        %467 = vmatpush1.bf16.msra.mxu0 %v454
        %468 = vmatprep.subr.bf16.mxu0 %v457
        %469 = vmatpush1.bf16.msra.mxu0 %v456
        %470 = vmatprep.subr.bf16.mxu0 0
        %471 = vmatpush1.bf16.msra.mxu0 0
        %472 = vmatprep.subr.bf16.mxu0 0
        %473 = vmatpush1.bf16.msra.mxu0 0
        %474 = vmatprep.subr.bf16.mxu0 0
        %475 = vmatpush1.bf16.msra.mxu0 0
        %476 = vmatprep.subr.bf16.mxu0 0
        %477 = vmatpush1.bf16.msra.mxu0 0
        %478 = vmatprep.subr.bf16.mxu0 0
        %479 = vmatpush1.bf16.msra.mxu0 0
        %480 = vmatprep.subr.bf16.mxu0 0
        %481 = vmatpush1.bf16.msra.mxu0 0
        %482 = vmatprep.subr.bf16.mxu0 0
        %483 = vmatpush1.bf16.msra.mxu0 0
        %484 = vmatprep.subr.bf16.mxu0 0
        %485 = vmatpush1.bf16.msra.mxu0 0
        %486 = vmatprep.subr.bf16.mxu0 0
        %487 = vmatpush1.bf16.msra.mxu0 0
        %488 = vmatprep.subr.bf16.mxu0 0
        %489 = vmatpush1.bf16.msra.mxu0 0
        %490 = vmatprep.subr.bf16.mxu0 0
        %491 = vmatpush1.bf16.msra.mxu0 0
        %492 = vmatprep.subr.bf16.mxu0 0
        %493 = vmatpush1.bf16.msra.mxu0 0
        %494 = vmatprep.mubr.bf16.mxu0 0
        %495 = vmatmul.mubr.bf16.gmra.mrb[0].mxu0 %v460
        %v496 = vpop.f32.mrb[0].mxu0
        %v497 = vadd.f32 0.0, %v496
        %v498 = vpop.f32.mrb[0].mxu0
        %v499 = vadd.f32 0.0, %v498
        %v500 = vpop.f32.mrb[0].mxu0
        %v501 = vpop.f32.mrb[0].mxu0
        %502 = vdwg.mxu0
        %v503 = vmax.f32 %v261, %v265
        %v504 = vmax.f32 %v263, %v267
        %v505 = vmax.f32 %v503, %v269
        %v506 = vmax.f32 %v504, %v271
        %v507 = vmax.f32 %v505, %v273
        %v508 = vmax.f32 %v506, %v275
        %v509 = vmax.f32 %v507, %v508
        %v510 = vrot.slane %v509, 4
        %v511 = vmax.f32 %v509, %v510
        %v512 = vrot.slane %v511, 2
        %v513 = vmax.f32 %v511, %v512
        %v514 = vrot.slane %v513, 1
        %v515 = vmax.f32 %v513, %v514
        %v516 = vmax.f32 %v262, %v266
        %v517 = vmax.f32 %v264, %v268
        %v518 = vmax.f32 %v516, %v270
        %v519 = vmax.f32 %v517, %v272
        %v520 = vmax.f32 %v518, %v274
        %v521 = vmax.f32 %v519, %v276
        %v522 = vmax.f32 %v520, %v521
        %v523 = vrot.slane %v522, 4
        %v524 = vmax.f32 %v522, %v523
        %v525 = vrot.slane %v524, 2
        %v526 = vmax.f32 %v524, %v525
        %v527 = vrot.slane %v526, 1
        %v528 = vmax.f32 %v526, %v527
        %v529 = vld [vmem:[%s216] sm:$0xff]
        %v530 = vld [vmem:[%s216 + $0x8] sm:$0xff]
        %v531 = vmax.f32 %v529, %v515
        %v532 = vmax.f32 %v530, %v528
        %v533 = vlog2.pop %v497
        %v534 = vmul.f32 %v533, 0.6931472
        %v535 = vlog2.pop %v499
        %v536 = vmul.f32 %v535, 0.6931472
        %v537 = vsub.f32 %v409, %v531
        %v538 = vsub.f32 %v409, %v532
        %v539 = vadd.f32 %v534, %v537
        %v540 = vadd.f32 %v536, %v538
        %v541 = vmul.f32 %v539, 1.442695
        %v542 = vpow.pop %v541
        %v543 = vmul.f32 %v540, 1.442695
        %v544 = vpow.pop %v543
        %v545 = vld [vmem:[%s223] sm:$0xff]
        %v546 = vld [vmem:[%s223 + $0x8] sm:$0xff]
        %v547 = vsub.f32 %v529, %v531
        %v548 = vsub.f32 %v530, %v532
        %v549 = vmul.f32 %v547, 1.442695
        %v550 = vpow.pop %v549
        %v551 = vmul.f32 %v548, 1.442695
        %v552 = vpow.pop %v551
        %v553 = vmul.f32 %v545, %v550
        %v554 = vmul.f32 %v546, %v552
        %v555 = vadd.f32 %v553, %v542
        %v556 = vadd.f32 %v554, %v544
        %557 = vst [vmem:[%s223] sm:$0xff] %v555
        %558 = vst [vmem:[%s223 + $0x8] sm:$0xff] %v556
        %559 = vst [vmem:[%s216] sm:$0xff] %v531
        %560 = vst [vmem:[%s216 + $0x8] sm:$0xff] %v532
        %v561 = vlaneseq
        %v562 = vand.u32 %v561, 127
        %v563 = vadd.s32 %v562, 128
        %v564 = vlaneseq
        %v565 = vshrl.u32 %v564, 7
        %v566 = vadd.s32 %v565, 8
        %v567 = vadd.s32 %v565, 16
        %v568 = vadd.s32 %v565, 24
        %v569 = vadd.s32 %v565, 32
        %v570 = vadd.s32 %v565, 40
        %v571 = vadd.s32 %v565, 48
        %v572 = vadd.s32 %v565, 56
        %v573 = vstv %s234
        %v574 = vadd.s32 %v573, %v565
        %v575 = vadd.s32 %v573, %v566
        %v576 = vadd.s32 %v573, %v567
        %v577 = vadd.s32 %v573, %v568
        %v578 = vadd.s32 %v573, %v569
        %v579 = vadd.s32 %v573, %v570
        %v580 = vadd.s32 %v573, %v571
        %v581 = vadd.s32 %v573, %v572
        %vm582 = vcmp.eq.s32.totalorder %v562, %v574
        %vm583 = vcmp.eq.s32.totalorder %v563, %v574
        %vm584 = vcmp.eq.s32.totalorder %v562, %v575
        %vm585 = vcmp.eq.s32.totalorder %v563, %v575
        %vm586 = vcmp.eq.s32.totalorder %v562, %v576
        %vm587 = vcmp.eq.s32.totalorder %v563, %v576
        %vm588 = vcmp.eq.s32.totalorder %v562, %v577
        %vm589 = vcmp.eq.s32.totalorder %v563, %v577
        %vm590 = vcmp.eq.s32.totalorder %v562, %v578
        %vm591 = vcmp.eq.s32.totalorder %v563, %v578
        %vm592 = vcmp.eq.s32.totalorder %v562, %v579
        %vm593 = vcmp.eq.s32.totalorder %v563, %v579
        %vm594 = vcmp.eq.s32.totalorder %v562, %v580
        %vm595 = vcmp.eq.s32.totalorder %v563, %v580
        %vm596 = vcmp.eq.s32.totalorder %v562, %v581
        %vm597 = vcmp.eq.s32.totalorder %v563, %v581
        %v598 = vsel %vm582, %v261, 0.0
        %v599 = vsel %vm583, %v262, 0.0
        %v600 = vsel %vm584, %v263, 0.0
        %v601 = vsel %vm585, %v264, 0.0
        %v602 = vsel %vm586, %v265, 0.0
        %v603 = vsel %vm587, %v266, 0.0
        %v604 = vsel %vm588, %v267, 0.0
        %v605 = vsel %vm589, %v268, 0.0
        %v606 = vsel %vm590, %v269, 0.0
        %v607 = vsel %vm591, %v270, 0.0
        %v608 = vsel %vm592, %v271, 0.0
        %v609 = vsel %vm593, %v272, 0.0
        %v610 = vsel %vm594, %v273, 0.0
        %v611 = vsel %vm595, %v274, 0.0
        %v612 = vsel %vm596, %v275, 0.0
        %v613 = vsel %vm597, %v276, 0.0
        %v614 = vadd.f32 %v598, %v599
        %v615 = vadd.f32 %v614, %v600
        %v616 = vadd.f32 %v615, %v601
        %v617 = vadd.f32 %v616, %v602
        %v618 = vadd.f32 %v617, %v603
        %v619 = vadd.f32 %v618, %v604
        %v620 = vadd.f32 %v619, %v605
        %v621 = vadd.f32 %v620, %v606
        %v622 = vadd.f32 %v621, %v607
        %v623 = vadd.f32 %v622, %v608
        %v624 = vadd.f32 %v623, %v609
        %v625 = vadd.f32 %v624, %v610
        %v626 = vadd.f32 %v625, %v611
        %v627 = vadd.f32 %v626, %v612
        %v628 = vadd.f32 %v627, %v613
        %629 = vadd.xlane.f32.xlu0 %v628
        %v630 = vpop.xlane.xlu0 %629
        %v631 = vrot.slane %v630, 4
        %v632 = vadd.f32 %v630, %v631
        %v633 = vrot.slane %v632, 2
        %v634 = vadd.f32 %v632, %v633
        %v635 = vrot.slane %v634, 1
        %v636 = vadd.f32 %v634, %v635
        %s637 = vtos %v636
        %v638 = vstv %s637
        %v639 = vld [vmem:[%s229] sm:$0x1]
        %vm640 = vcmask 7168
        %v641 = vsel %vm640, %v389, 0.0
        %v642 = vsel %vm640, %v390, 0.0
        %v643 = vadd.f32 %v641, %v642
        %v644 = vsel %vm640, %v391, 0.0
        %v645 = vadd.f32 %v643, %v644
        %v646 = vsel %vm640, %v392, 0.0
        %v647 = vadd.f32 %v645, %v646
        %v648 = vsel %vm640, %v393, 0.0
        %v649 = vadd.f32 %v647, %v648
        %v650 = vsel %vm640, %v394, 0.0
        %v651 = vadd.f32 %v649, %v650
        %v652 = vsel %vm640, %v395, 0.0
        %v653 = vadd.f32 %v651, %v652
        %v654 = vsel %vm640, %v396, 0.0
        %v655 = vadd.f32 %v653, %v654
        %656 = vadd.xlane.f32.xlu0 %v655
        %v657 = vpop.xlane.xlu0 %656
        %v658 = vrot.slane %v657, 4
        %v659 = vadd.f32 %v657, %v658
        %v660 = vrot.slane %v659, 2
        %v661 = vadd.f32 %v659, %v660
        %v662 = vrot.slane %v661, 1
        %v663 = vadd.f32 %v661, %v662
        %s664 = vtos %v663
        %v665 = vstv %s664
        %v666 = vmul.f32 %v638, 2.0
        %v667 = vsub.f32 %v665, %v666
        %v668 = vadd.f32 %v639, %v667
        %vm669 = vcmask 0
        %670 = vst.msk [vmem:[%s229] sm:$0x1] %vm669, %v668
        %p671 = scmp.lt.s32.totalorder %s28, 1
        %s672 = scalar_select %p671, %s28, 1
        %s673 = scalar_lea.vmem %s1, %s672
        %s674 = sand.u32 %s100, 1
        %s675 = scalar_lea.sflag [#allocation4], %s674
        %s676 = sand.u32 %s100, 1
        %s677 = smul.addr %s676, 16
        %s678 = scalar_lea.vmem [#allocation5], %s677
        %s679 = sand.u32 %s126, 1
        %s680 = scalar_lea.sflag [#allocation7], %s679
        %s681 = sand.u32 %s126, 1
        %s682 = smul.addr %s681, 16
        %s683 = scalar_lea.vmem [#allocation6], %s682
        // Predicated region
        $region33: #{tpu_custom_call.1} parent=23 // pred_check
          %p684 = pneg %p84
        $region34: #{tpu_custom_call.1} parent=23 // pred_check_branch
          %686 = sbr.rel (%p684) target = $region36
        $region35: #{tpu_custom_call.1} parent=23 // pred_region
          _
        $region36: #{tpu_custom_call.1} parent=23 // pred_fallthru
          _
        // Predicated region
        $region37: #{tpu_custom_call.1} parent=23 // pred_check
          %p687 = pneg %p110
        $region38: #{tpu_custom_call.1} parent=23 // pred_check_branch
          %689 = sbr.rel (%p687) target = $region40
        $region39: #{tpu_custom_call.1} parent=23 // pred_region
          %s691 = ssub.s32 256, 256
          %692 = vsyncadd %s675, %s691
          %s693 = smul.addr %s28, 2
          %s694 = smul.addr %s693, 128
          %s695 = scalar_lea.hbm %s2, %s694
          %s697 = sshll.u32 %s678, 4
          %s698 = int_to_ptr.vmem [resolvable:$true] %s697
          %700 = dma.vmem_to_hbm [thread:$0]  %s698, 256, %s695, %s675
        $region40: #{tpu_custom_call.1} parent=23 // pred_fallthru
          _
        // Predicated region
        $region41: #{tpu_custom_call.1} parent=23 // pred_check
          %p701 = pneg %p136
        $region42: #{tpu_custom_call.1} parent=23 // pred_check_branch
          %703 = sbr.rel (%p701) target = $region44
        $region43: #{tpu_custom_call.1} parent=23 // pred_region
          %s705 = ssub.s32 256, 256
          %706 = vsyncadd %s680, %s705
          %s707 = smul.addr %s28, 2
          %s708 = smul.addr %s707, 128
          %s709 = scalar_lea.hbm %s3, %s708
          %s711 = sshll.u32 %s683, 4
          %s712 = int_to_ptr.vmem [resolvable:$true] %s711
          %714 = dma.vmem_to_hbm [thread:$0]  %s712, 256, %s709, %s680
        $region44: #{tpu_custom_call.1} parent=23 // pred_fallthru
          _
      $region24: #{tpu_custom_call.1} parent=5 // pred_fallthru
        _
      %p715 = scmp.le.s32.totalorder 2, %s19
      // Predicated region
      $region45: #{tpu_custom_call.1} parent=5 // pred_check
        %p716 = pneg %p715
      $region46: #{tpu_custom_call.1} parent=5 // pred_check_branch
        %718 = sbr.rel (%p716) target = $region48
      $region47: #{tpu_custom_call.1} parent=5 // pred_region
        %s719 = ssub.s32 %s19, 2
        // Predicated region
        $region49: #{tpu_custom_call.1} parent=47 // pred_check
          %p720 = pneg %p90
        $region50: #{tpu_custom_call.1} parent=47 // pred_check_branch
          %722 = sbr.rel (%p720) target = $region52
        $region51: #{tpu_custom_call.1} parent=47 // pred_region
          %p723 = scmp.lt.s32.totalorder %s30, 1
          %s724 = scalar_select %p723, %s30, 1
          %s725 = scalar_lea.vmem %s1, %s724
        $region52: #{tpu_custom_call.1} parent=47 // pred_fallthru
          _
        // Predicated region
        $region53: #{tpu_custom_call.1} parent=47 // pred_check
          %p726 = pneg %p116
        $region54: #{tpu_custom_call.1} parent=47 // pred_check_branch
          %728 = sbr.rel (%p726) target = $region56
        $region55: #{tpu_custom_call.1} parent=47 // pred_region
          %s729 = sand.u32 %s101, 1
          %s730 = scalar_lea.sflag [#allocation4], %s729
          %s731 = sand.u32 %s101, 1
          %s732 = smul.addr %s731, 16
          %s733 = scalar_lea.vmem [#allocation5], %s732
          %734 = dma.done %s730, 256
        $region56: #{tpu_custom_call.1} parent=47 // pred_fallthru
          _
        // Predicated region
        $region57: #{tpu_custom_call.1} parent=47 // pred_check
          %p735 = pneg %p142
        $region58: #{tpu_custom_call.1} parent=47 // pred_check_branch
          %737 = sbr.rel (%p735) target = $region60
        $region59: #{tpu_custom_call.1} parent=47 // pred_region
          %s738 = sand.u32 %s127, 1
          %s739 = scalar_lea.sflag [#allocation7], %s738
          %s740 = sand.u32 %s127, 1
          %s741 = smul.addr %s740, 16
          %s742 = scalar_lea.vmem [#allocation6], %s741
          %743 = dma.done %s739, 256
        $region60: #{tpu_custom_call.1} parent=47 // pred_fallthru
          _
      $region48: #{tpu_custom_call.1} parent=5 // pred_fallthru
        _
    $region6: #{tpu_custom_call.1} parent=1 // loop_footer
      %s23 = sadd.s32 1, %s19
    $region7: #{tpu_custom_call.1} parent=1 // loop_footer_branch
      %18 = sbr.rel target = $region3
    $region8: #{tpu_custom_call.1} parent=1 // loop_exit
      _
    %744 = vsyncpa [#allocation3], 1
    %s745 = scalar_lea.sflag [#allocation3], 1
    %746 = vsyncpa %s745, 1
    %747 = vsyncpa [#allocation4], 1
    %s748 = scalar_lea.sflag [#allocation4], 1
    %749 = vsyncpa %s748, 1
    %750 = vsyncpa [#allocation7], 1
    %s751 = scalar_lea.sflag [#allocation7], 1
    %752 = vsyncpa %s751, 1

</llo_original>
